<compile_context>
chip_gen: v5e
topology: v5e:2x2
jax: 0.10.0
libtpu: 0.0.40
codegen_flags: <defaults>
</compile_context>

<pallas_src>
import functools

import jax
import jax.numpy as jnp
from jax.experimental import pallas as pl
from jax.experimental.pallas import tpu as pltpu


def _specialized_convnet_kernel(p_ref, w_ref, b_ref, o_ref, *, BT, HW, C_out):
    # p_ref: (BT*HW, 9*C_in) bf16  im2col patches, rows ordered (t, quadrant, ph, pw)
    # w_ref: (9*C_in, C_out) bf16  conv weight with BN scale folded in
    # b_ref: (1, C_out)      f32   folded bias (conv bias + BN shift)
    # o_ref: (1, BT, C_out)  f32   pooled features for this batch tile
    acc = jnp.dot(p_ref[...], w_ref[...],
                  preferred_element_type=jnp.float32)        # (BT*HW, C_out) f32
    y = jnp.maximum(acc + b_ref[...], 0.0)                   # folded BN bias + ReLU

    Q = HW // 4                       # 49 pooled positions per image (7x7 map)
    inv_q = 1.0 / float(Q)
    pooled = []
    for t in range(BT):
        img = y[t * HW:(t + 1) * HW]                         # (196, C_out)
        # MaxPool2d(2): elementwise max of the four quadrant slabs.
        m = jnp.maximum(jnp.maximum(img[0:Q], img[Q:2 * Q]),
                        jnp.maximum(img[2 * Q:3 * Q], img[3 * Q:4 * Q]))
        # AvgPool2d(7) covers the whole 7x7 map: one sublane reduction.
        pooled.append(jnp.sum(m, axis=0, keepdims=True) * inv_q)
    o_ref[0] = jnp.concatenate(pooled, axis=0)               # (BT, C_out), dense store


def specialized_convnet_forward(x, conv_w, conv_b, bn_gamma, bn_beta,
                                bn_mean, bn_var, eps=1e-5, block_batch=8):
    """x: NCHW float32 (spatial must be 14x14). Returns (B, C_out) features."""
    B, C_in, H, W = x.shape
    C_out = conv_w.shape[0]
    # AvgPool2d(7) after MaxPool2d(2) covers the full map only for 14x14 input
    # (matching the real 128->512 @ 14x14 block).
    assert H == 14 and W == 14, "kernel assumes 14x14 spatial input"
    HW = H * W
    K9 = 9 * C_in

    BT = min(block_batch, B)
    assert B % BT == 0, "batch must be divisible by the batch tile"
    assert (BT * HW) % 8 == 0, "batch tile must keep the M block 8-row aligned"

    # ---- glue (plain JAX): layout change, im2col, parameter folding ----------
    x_nhwc = jnp.transpose(x, (0, 2, 3, 1)).astype(jnp.float32)
    x_pad = jnp.pad(x_nhwc, ((0, 0), (1, 1), (1, 1), (0, 0)))        # padding=1
    patches = jnp.concatenate(
        [x_pad[:, dh:dh + H, dw:dw + W, :]
         for dh in range(3) for dw in range(3)], axis=-1)             # (B,H,W,9*C_in)
    # Reorder rows to (b, 2x2-quadrant, ph, pw) so pooling vectorizes in-kernel.
    patches = patches.reshape(B, H // 2, 2, W // 2, 2, K9)
    patches = patches.transpose(0, 2, 4, 1, 3, 5)                     # (B,hq,wq,ph,pw,K9)
    patches = patches.reshape(B * HW, K9).astype(jnp.bfloat16)

    # Conv weight (C_out,C_in,3,3) -> (9*C_in, C_out); fold BN scale in (f32->bf16).
    w2 = jnp.transpose(conv_w, (2, 3, 1, 0)).reshape(K9, C_out).astype(jnp.float32)
    scale = bn_gamma / jnp.sqrt(bn_var + eps)                         # (C_out,)
    w_scaled = (w2 * scale[None, :]).astype(jnp.bfloat16)
    bias = ((conv_b - bn_mean) * scale + bn_beta).reshape(1, C_out).astype(jnp.float32)

    kernel = functools.partial(_specialized_convnet_kernel,
                               BT=BT, HW=HW, C_out=C_out)
    out = pl.pallas_call(
        kernel,
        out_shape=jax.ShapeDtypeStruct((B // BT, BT, C_out), jnp.float32),
        grid_spec=pltpu.PrefetchScalarGridSpec(
            num_scalar_prefetch=0,
            grid=(B // BT,),
            in_specs=[
                pl.BlockSpec((BT * HW, K9), lambda i: (i, 0)),
                pl.BlockSpec((K9, C_out), lambda i: (0, 0)),
                pl.BlockSpec((1, C_out), lambda i: (0, 0)),
            ],
            out_specs=pl.BlockSpec((1, BT, C_out), lambda i: (i, 0, 0)),
        ),
        compiler_params=pltpu.CompilerParams(
            dimension_semantics=("parallel",)),
    )(patches, w_scaled, bias)
    return out.reshape(B, C_out)


def reference_forward(x, conv_w, conv_b, gamma, beta, mean, var, eps=1e-5):
    """Plain-JAX f32 reference matching PyTorch eval-mode semantics."""
    y = jax.lax.conv_general_dilated(
        x, conv_w, window_strides=(1, 1), padding="SAME",
        dimension_numbers=("NCHW", "OIHW", "NCHW"))
    y = y + conv_b[None, :, None, None]
    y = (y - mean[None, :, None, None]) * (
        gamma / jnp.sqrt(var + eps))[None, :, None, None]
    y = y + beta[None, :, None, None]
    y = jnp.maximum(y, 0.0)
    B, C, H, W = y.shape
    y = y.reshape(B, C, H // 2, 2, W // 2, 2).max(axis=(3, 5))        # MaxPool2d(2)
    y = y.mean(axis=(2, 3))                                           # AvgPool2d(7)
    return y                                                          # (B, C)


if __name__ == "__main__":
    # Small proxy shapes (real block is 128 -> 512 at 14x14). Spatial must be 14.
    B, C_in, C_out, H, W = 4, 16, 32, 14, 14
    key = jax.random.PRNGKey(0)
    k = jax.random.split(key, 7)
    x = jax.random.normal(k[0], (B, C_in, H, W), jnp.float32)
    conv_w = 0.1 * jax.random.normal(k[1], (C_out, C_in, 3, 3), jnp.float32)
    conv_b = 0.1 * jax.random.normal(k[2], (C_out,), jnp.float32)
    bn_gamma = 1.0 + 0.1 * jax.random.normal(k[3], (C_out,), jnp.float32)
    bn_beta = 0.1 * jax.random.normal(k[4], (C_out,), jnp.float32)
    bn_mean = 0.1 * jax.random.normal(k[5], (C_out,), jnp.float32)
    bn_var = 1.0 + 0.1 * jnp.abs(jax.random.normal(k[6], (C_out,), jnp.float32))

    # BT=2 -> grid of 2 parallel batch tiles (keeps >=2 steps for v7x's 2 cores).
    out = specialized_convnet_forward(x, conv_w, conv_b, bn_gamma, bn_beta,
                                      bn_mean, bn_var, block_batch=2)
    out = jax.block_until_ready(out)

    ref = reference_forward(x, conv_w, conv_b, bn_gamma, bn_beta,
                            bn_mean, bn_var)
    assert out.shape == (B, C_out), out.shape
    # bf16 patches/weights with f32 accumulation: loosened tolerance vs f32 ref.
    assert jnp.allclose(out, ref, atol=5e-2, rtol=5e-2), (
        float(jnp.max(jnp.abs(out - ref))))
    print("KERNEL_OK")
</pallas_src>

<mosaic_0001>
module attributes {stable_mosaic.version = 11 : i64} {
  func.func @_specialized_convnet_kernel(%arg0: i32, %arg1: memref<392x144xbf16, #tpu.memory_space<vmem>>, %arg2: memref<144x32xbf16, #tpu.memory_space<vmem>>, %arg3: memref<1x32xf32, #tpu.memory_space<vmem>>, %arg4: memref<1x2x32xf32, #tpu.memory_space<vmem>>) attributes {dimension_semantics = [#tpu.dimension_semantics<parallel>], iteration_bounds = array<i64: 2>, scalar_prefetch = 0 : i64, scratch_operands = 0 : i64, tpu.core_type = #tpu.core_type<tc>, window_params = [{transform_indices = @transform_0, window_bounds = array<i64: 392, 144>}, {pipeline_mode = #tpu.pipeline_mode<synchronous>, transform_indices = @transform_1, window_bounds = array<i64: 144, 32>}, {pipeline_mode = #tpu.pipeline_mode<synchronous>, transform_indices = @transform_2, window_bounds = array<i64: 1, 32>}, {transform_indices = @transform_3, window_bounds = array<i64: 1, 2, 32>}]} {
    %c0 = arith.constant 0 : index
    %c0_0 = arith.constant 0 : index
    %0 = vector.load %arg1[%c0, %c0_0] : memref<392x144xbf16, #tpu.memory_space<vmem>>, vector<392x144xbf16>
    %c0_1 = arith.constant 0 : index
    %c0_2 = arith.constant 0 : index
    %1 = vector.load %arg2[%c0_1, %c0_2] : memref<144x32xbf16, #tpu.memory_space<vmem>>, vector<144x32xbf16>
    %cst = arith.constant dense<0.000000e+00> : vector<392x32xf32>
    %2 = tpu.matmul %0, %1, %cst {dimension_numbers = #tpu.dot_dimension_numbers<[1], [0], [0], [1], [0, 0, 1, 1], [], []>} : vector<392x144xbf16>, vector<144x32xbf16>, vector<392x32xf32> -> vector<392x32xf32>
    %c0_3 = arith.constant 0 : index
    %c0_4 = arith.constant 0 : index
    %3 = vector.load %arg3[%c0_3, %c0_4] : memref<1x32xf32, #tpu.memory_space<vmem>>, vector<1x32xf32>
    %4 = vector.broadcast %3 : vector<1x32xf32> to vector<392x32xf32>
    %5 = arith.addf %2, %4 : vector<392x32xf32>
    %cst_5 = arith.constant 0.000000e+00 : f32
    %6 = vector.broadcast %cst_5 : f32 to vector<392x32xf32>
    %7 = arith.maximumf %5, %6 : vector<392x32xf32>
    %8 = vector.extract_strided_slice %7 {offsets = [0, 0], sizes = [196, 32], strides = [1, 1]} : vector<392x32xf32> to vector<196x32xf32>
    %9 = vector.extract_strided_slice %8 {offsets = [0, 0], sizes = [49, 32], strides = [1, 1]} : vector<196x32xf32> to vector<49x32xf32>
    %10 = vector.extract_strided_slice %8 {offsets = [49, 0], sizes = [49, 32], strides = [1, 1]} : vector<196x32xf32> to vector<49x32xf32>
    %11 = arith.maximumf %9, %10 : vector<49x32xf32>
    %12 = vector.extract_strided_slice %8 {offsets = [98, 0], sizes = [49, 32], strides = [1, 1]} : vector<196x32xf32> to vector<49x32xf32>
    %13 = vector.extract_strided_slice %8 {offsets = [147, 0], sizes = [49, 32], strides = [1, 1]} : vector<196x32xf32> to vector<49x32xf32>
    %14 = arith.maximumf %12, %13 : vector<49x32xf32>
    %15 = arith.maximumf %11, %14 : vector<49x32xf32>
    %cst_6 = arith.constant dense<0.000000e+00> : vector<32xf32>
    %16 = vector.multi_reduction <add>, %15, %cst_6 [0] : vector<49x32xf32> to vector<32xf32>
    %17 = vector.shape_cast %16 : vector<32xf32> to vector<1x32xf32>
    %cst_7 = arith.constant 0.0204081628 : f32
    %18 = vector.broadcast %cst_7 : f32 to vector<1x32xf32>
    %19 = arith.mulf %17, %18 : vector<1x32xf32>
    %20 = vector.extract_strided_slice %7 {offsets = [196, 0], sizes = [196, 32], strides = [1, 1]} : vector<392x32xf32> to vector<196x32xf32>
    %21 = vector.extract_strided_slice %20 {offsets = [0, 0], sizes = [49, 32], strides = [1, 1]} : vector<196x32xf32> to vector<49x32xf32>
    %22 = vector.extract_strided_slice %20 {offsets = [49, 0], sizes = [49, 32], strides = [1, 1]} : vector<196x32xf32> to vector<49x32xf32>
    %23 = arith.maximumf %21, %22 : vector<49x32xf32>
    %24 = vector.extract_strided_slice %20 {offsets = [98, 0], sizes = [49, 32], strides = [1, 1]} : vector<196x32xf32> to vector<49x32xf32>
    %25 = vector.extract_strided_slice %20 {offsets = [147, 0], sizes = [49, 32], strides = [1, 1]} : vector<196x32xf32> to vector<49x32xf32>
    %26 = arith.maximumf %24, %25 : vector<49x32xf32>
    %27 = arith.maximumf %23, %26 : vector<49x32xf32>
    %cst_8 = arith.constant dense<0.000000e+00> : vector<32xf32>
    %28 = vector.multi_reduction <add>, %27, %cst_8 [0] : vector<49x32xf32> to vector<32xf32>
    %29 = vector.shape_cast %28 : vector<32xf32> to vector<1x32xf32>
    %cst_9 = arith.constant 0.0204081628 : f32
    %30 = vector.broadcast %cst_9 : f32 to vector<1x32xf32>
    %31 = arith.mulf %29, %30 : vector<1x32xf32>
    %32 = tpu.concatenate %19, %31 in 0 : vector<1x32xf32>, vector<1x32xf32> -> vector<2x32xf32>
    %c0_10 = arith.constant 0 : index
    %c0_11 = arith.constant 0 : index
    %c0_12 = arith.constant 0 : index
    %33 = vector.load %arg4[%c0_10, %c0_11, %c0_12] : memref<1x2x32xf32, #tpu.memory_space<vmem>>, vector<1x2x32xf32>
    %34 = vector.shape_cast %33 : vector<1x2x32xf32> to vector<2x32xf32>
    %35 = vector.shape_cast %32 : vector<2x32xf32> to vector<1x2x32xf32>
    tpu.vector_store %arg4[%c0_10, %c0_11, %c0_12], %35 {strides = array<i32>} : memref<1x2x32xf32, #tpu.memory_space<vmem>>, vector<1x2x32xf32>,
    return
  }
  func.func @transform_0(%arg0: i32) -> (i32, i32) {
    %c0_i32 = arith.constant 0 : i32
    %c0_i32_0 = arith.constant 0 : i32
    return %arg0, %c0_i32 : i32, i32
  }
  func.func @transform_1(%arg0: i32) -> (i32, i32) {
    %c0_i32 = arith.constant 0 : i32
    %c0_i32_0 = arith.constant 0 : i32
    %c0_i32_1 = arith.constant 0 : i32
    return %c0_i32, %c0_i32_0 : i32, i32
  }
  func.func @transform_2(%arg0: i32) -> (i32, i32) {
    %c0_i32 = arith.constant 0 : i32
    %c0_i32_0 = arith.constant 0 : i32
    %c0_i32_1 = arith.constant 0 : i32
    return %c0_i32, %c0_i32_0 : i32, i32
  }
  func.func @transform_3(%arg0: i32) -> (i32, i32, i32) {
    %c0_i32 = arith.constant 0 : i32
    %c0_i32_0 = arith.constant 0 : i32
    %c0_i32_1 = arith.constant 0 : i32
    return %arg0, %c0_i32, %c0_i32_0 : i32, i32, i32
  }
}

</mosaic_0001>

<llo_original>
// kernel: tpu_custom_call.1
$region0: #{tpu_custom_call.1}
  #allocation0 [shape = 'u32[]', space=smem, size = 0x4, offset = 0x4, fixed_abs, tag = 'smem constant byte address 0x4 - core index']
  #allocation1 [shape = 'u32[72,128]{1,0:T(1,128)}', space=vmem, size = 0x9000, scoped, tag = 'internal scratch']
  %s0 = inlined_call_operand.vmem [shape: bf16[784,144], index: 0, kind: input, shape index: {}]
  %s1 = inlined_call_operand.vmem [shape: bf16[144,32], index: 1, kind: input, shape index: {}]
  %s2 = inlined_call_operand.vmem [shape: f32[1,32], index: 2, kind: input, shape index: {}]
  %s3 = inlined_call_operand.hbm [shape: f32[2,2,32], index: 3, kind: output, shape index: {}]
  %s4 = sld [smem:[#allocation0]]
  $region45: #{tpu_custom_call.1} parent=0
    _
  %s6 = ssub.s32 1, %s4
  %s7 = scalar_select 0, %s6, %s4
  $region1: #{tpu_custom_call.1} parent=0
    #allocation2 [shape = 'u8[2048]{0}', space=vmem, size = 0x800, scoped, tag = 'output window, operand 0']
    #allocation3 [shape = 's32[2]{0}', space=sflag, size = 0x8, scoped, tag = 'scoped memory for tpu_custom_call.1']
    %8 = vsyncpa [#allocation3], 0
    %s9 = scalar_lea.sflag [#allocation3], 1
    %10 = vsyncpa %s9, 0
    loop: start=0, step=1, limit=4
    $region2: #{tpu_custom_call.1} parent=1 // loop_pre_header
      _
    $region3: #{tpu_custom_call.1} parent=1 // loop_header
      %s12 = sphi 0, %s16
      %p13 = scmp.ge.s32.totalorder %s12, 4
      %s22 = sphi 0, %s24
      %s25 = sphi 0, %s22
      %s26 = sphi 0, %s25
      %s42 = sphi 0, %s26
      %s46 = sphi 0, %s46
      %s48 = sphi 0, %s46
      %s49 = sphi 0, %s48
      %s63 = sphi 0, %s49
      %s67 = sphi 0, %s67
      %s69 = sphi 0, %s67
      %s70 = sphi 0, %s69
      %s84 = sphi 0, %s70
      %s90 = sphi 0, %s92
      %s93 = sphi 0, %s90
      %s94 = sphi 0, %s93
      %s110 = sphi 0, %s94
    $region4: #{tpu_custom_call.1} parent=1 // loop_header_branch
      %15 = sbr.rel (%p13) target = $region8
    $region5: #{tpu_custom_call.1} parent=1 // loop_body
      %s17 = ssub.s32 %s12, 1
      %s18 = ssub.s32 %s12, 2
      %s19 = sadd.s32 %s12, 1
      %s20 = ssub.s32 %s12, %s19
      %p21 = scmp.eq.s32.totalorder %s20, 0
      %s23 = sadd.s32 %s22, 1
      %s24 = scalar_select %p21, %s22, %s23
      %p27 = pneg %p21
      %p28 = scmp.eq.s32.totalorder %s12, 1
      %p29 = por %p27, %p28
      %p30 = scmp.ne.s32.totalorder %s22, %s25
      %p31 = scmp.eq.s32.totalorder %s12, 0
      %p32 = por %p30, %p31
      %p33 = scmp.ne.s32.totalorder %s22, %s25
      %p34 = scmp.eq.s32.totalorder %s17, 1
      %p35 = por %p33, %p34
      %p36 = scmp.ne.s32.totalorder %s25, %s26
      %p37 = scmp.eq.s32.totalorder %s17, 0
      %p38 = por %p36, %p37
      %p39 = scmp.ne.s32.totalorder %s25, %s26
      %p40 = scmp.eq.s32.totalorder %s18, 1
      %p41 = por %p39, %p40
      %p43 = scmp.ne.s32.totalorder %s26, %s42
      %p44 = scmp.eq.s32.totalorder %s18, 0
      %p45 = por %p43, %p44
      %s47 = sadd.s32 %s46, 1
      %p50 = scmp.eq.s32.totalorder %s12, 1
      %p51 = scmp.ne.s32.totalorder %s46, %s48
      %p52 = scmp.eq.s32.totalorder %s12, 0
      %p53 = por %p51, %p52
      %p54 = scmp.ne.s32.totalorder %s46, %s48
      %p55 = scmp.eq.s32.totalorder %s17, 1
      %p56 = por %p54, %p55
      %p57 = scmp.ne.s32.totalorder %s48, %s49
      %p58 = scmp.eq.s32.totalorder %s17, 0
      %p59 = por %p57, %p58
      %p60 = scmp.ne.s32.totalorder %s48, %s49
      %p61 = scmp.eq.s32.totalorder %s18, 1
      %p62 = por %p60, %p61
      %p64 = scmp.ne.s32.totalorder %s49, %s63
      %p65 = scmp.eq.s32.totalorder %s18, 0
      %p66 = por %p64, %p65
      %s68 = sadd.s32 %s67, 1
      %p71 = scmp.eq.s32.totalorder %s12, 1
      %p72 = scmp.ne.s32.totalorder %s67, %s69
      %p73 = scmp.eq.s32.totalorder %s12, 0
      %p74 = por %p72, %p73
      %p75 = scmp.ne.s32.totalorder %s67, %s69
      %p76 = scmp.eq.s32.totalorder %s17, 1
      %p77 = por %p75, %p76
      %p78 = scmp.ne.s32.totalorder %s69, %s70
      %p79 = scmp.eq.s32.totalorder %s17, 0
      %p80 = por %p78, %p79
      %p81 = scmp.ne.s32.totalorder %s69, %s70
      %p82 = scmp.eq.s32.totalorder %s18, 1
      %p83 = por %p81, %p82
      %p85 = scmp.ne.s32.totalorder %s70, %s84
      %p86 = scmp.eq.s32.totalorder %s18, 0
      %p87 = por %p85, %p86
      %s88 = ssub.s32 %s12, %s19
      %p89 = scmp.eq.s32.totalorder %s88, 0
      %s91 = sadd.s32 %s90, 1
      %s92 = scalar_select %p89, %s90, %s91
      %p95 = pneg %p89
      %p96 = scmp.eq.s32.totalorder %s12, 1
      %p97 = por %p95, %p96
      %p98 = scmp.ne.s32.totalorder %s90, %s93
      %p99 = scmp.eq.s32.totalorder %s12, 0
      %p100 = por %p98, %p99
      %p101 = scmp.ne.s32.totalorder %s90, %s93
      %p102 = scmp.eq.s32.totalorder %s17, 1
      %p103 = por %p101, %p102
      %p104 = scmp.ne.s32.totalorder %s93, %s94
      %p105 = scmp.eq.s32.totalorder %s17, 0
      %p106 = por %p104, %p105
      %p107 = scmp.ne.s32.totalorder %s93, %s94
      %p108 = scmp.eq.s32.totalorder %s18, 1
      %p109 = por %p107, %p108
      %p111 = scmp.ne.s32.totalorder %s94, %s110
      %p112 = scmp.eq.s32.totalorder %s18, 0
      %p113 = por %p111, %p112
      %p114 = scmp.le.s32.totalorder 1, %s12
      %p115 = scmp.lt.s32.totalorder %s12, 3
      %p116 = pnand %p114, %p115
      %p117 = pneg %p116
      // Predicated region
      $region9: #{tpu_custom_call.1} parent=5 // pred_check
        _
      $region10: #{tpu_custom_call.1} parent=5 // pred_check_branch
        %119 = sbr.rel (%p116) target = $region12
      $region11: #{tpu_custom_call.1} parent=5 // pred_region
        %s120 = ssub.s32 %s12, 1
        // Predicated region
        $region13: #{tpu_custom_call.1} parent=11 // pred_check
          %p121 = pneg %p59
        $region14: #{tpu_custom_call.1} parent=11 // pred_check_branch
          %123 = sbr.rel (%p121) target = $region16
        $region15: #{tpu_custom_call.1} parent=11 // pred_region
          _
        $region16: #{tpu_custom_call.1} parent=11 // pred_fallthru
          _
        // Predicated region
        $region17: #{tpu_custom_call.1} parent=11 // pred_check
          %p124 = pneg %p80
        $region18: #{tpu_custom_call.1} parent=11 // pred_check_branch
          %126 = sbr.rel (%p124) target = $region20
        $region19: #{tpu_custom_call.1} parent=11 // pred_region
          _
        $region20: #{tpu_custom_call.1} parent=11 // pred_fallthru
          _
      $region12: #{tpu_custom_call.1} parent=5 // pred_fallthru
        _
      %p127 = scmp.lt.s32.totalorder %s12, 2
      // Predicated region
      $region21: #{tpu_custom_call.1} parent=5 // pred_check
        %p128 = pneg %p127
      $region22: #{tpu_custom_call.1} parent=5 // pred_check_branch
        %130 = sbr.rel (%p128) target = $region24
      $region23: #{tpu_custom_call.1} parent=5 // pred_region
        // Predicated region
        $region25: #{tpu_custom_call.1} parent=23 // pred_check
          %p131 = pneg %p32
        $region26: #{tpu_custom_call.1} parent=23 // pred_check_branch
          %133 = sbr.rel (%p131) target = $region28
        $region27: #{tpu_custom_call.1} parent=23 // pred_region
          %s134 = smul.u32 49, %s12
          %p135 = scmp.lt.s32.totalorder %s134, 97
          %s136 = scalar_select %p135, %s134, 97
          %s137 = smul.addr %s136, 2
          %s138 = smul.addr %s137, 4
          %s139 = scalar_lea.vmem %s0, %s138
          %s140 = smul.u32 49, %s12
        $region28: #{tpu_custom_call.1} parent=23 // pred_fallthru
          _
      $region24: #{tpu_custom_call.1} parent=5 // pred_fallthru
        _
      %p141 = scmp.le.s32.totalorder 1, %s12
      %p142 = scmp.lt.s32.totalorder %s12, 3
      %p143 = pnand %p141, %p142
      %p144 = pneg %p143
      // Predicated region
      $region29: #{tpu_custom_call.1} parent=5 // pred_check
        _
      $region30: #{tpu_custom_call.1} parent=5 // pred_check_branch
        %146 = sbr.rel (%p143) target = $region32
      $region31: #{tpu_custom_call.1} parent=5 // pred_region
        %s147 = ssub.s32 %s12, 1
        %s148 = smul.u32 49, %s17
        %p149 = scmp.lt.s32.totalorder %s148, 97
        %s150 = scalar_select %p149, %s148, 97
        %s151 = smul.addr %s150, 2
        %s152 = smul.addr %s151, 4
        %s153 = scalar_lea.vmem %s0, %s152
        %p154 = pneg %p38
        %p155 = pneg %p35
        %p156 = pneg %p59
        %p157 = pneg %p56
        %p158 = pneg %p80
        %p159 = pneg %p77
        %p160 = pneg %p106
        %p161 = pneg %p103
        %s162 = sand.u32 %s93, 1
        %s163 = scalar_lea.sflag [#allocation3], %s162
        %s164 = sand.u32 %s93, 1
        %s165 = smul.addr %s164, 2
        %s166 = scalar_lea.vmem [#allocation2], %s165
        %s167 = smul.u32 49, %s17
        %p168 = scmp.lt.s32.totalorder %s167, 97
        %s169 = scalar_select %p168, %s167, 97
        %s170 = smul.addr %s169, 2
        %s171 = smul.addr %s170, 4
        %s172 = scalar_lea.vmem %s0, %s171
        %s173 = smul.u32 49, %s17
        %v175 = vld [vmem:[%s172] sm:$0xff]
        %v176 = vld [vmem:[%s172 + $0x8] sm:$0xff]
        %v177 = vld [vmem:[%s172 + $0x10] sm:$0xff]
        %v178 = vld [vmem:[%s172 + $0x18] sm:$0xff]
        %v179 = vld [vmem:[%s172 + $0x20] sm:$0xff]
        %v180 = vld [vmem:[%s172 + $0x28] sm:$0xff]
        %v181 = vld [vmem:[%s172 + $0x30] sm:$0xff]
        %v182 = vld [vmem:[%s172 + $0x38] sm:$0xff]
        %v183 = vld [vmem:[%s172 + $0x40] sm:$0xff]
        %v184 = vld [vmem:[%s172 + $0x48] sm:$0xff]
        %v185 = vld [vmem:[%s172 + $0x50] sm:$0xff]
        %v186 = vld [vmem:[%s172 + $0x58] sm:$0xff]
        %v187 = vld [vmem:[%s172 + $0x60] sm:$0xff]
        %v188 = vld [vmem:[%s172 + $0x68] sm:$0xff]
        %v189 = vld [vmem:[%s172 + $0x70] sm:$0xff]
        %v190 = vld [vmem:[%s172 + $0x78] sm:$0xff]
        %v191 = vld [vmem:[%s172 + $0x80] sm:$0xff]
        %v192 = vld [vmem:[%s172 + $0x88] sm:$0xff]
        %v193 = vld [vmem:[%s172 + $0x90] sm:$0xff]
        %v194 = vld [vmem:[%s172 + $0x98] sm:$0xff]
        %v195 = vld [vmem:[%s172 + $0xa0] sm:$0xff]
        %v196 = vld [vmem:[%s172 + $0xa8] sm:$0xff]
        %v197 = vld [vmem:[%s172 + $0xb0] sm:$0xff]
        %v198 = vld [vmem:[%s172 + $0xb8] sm:$0xff]
        %v199 = vld [vmem:[%s172 + $0xc0] sm:$0xff]
        %v200 = vld [vmem:[%s172 + $0xc8] sm:$0xff]
        %v201 = vld [vmem:[%s172 + $0xd0] sm:$0xff]
        %v202 = vld [vmem:[%s172 + $0xd8] sm:$0xff]
        %v203 = vld [vmem:[%s172 + $0xe0] sm:$0xff]
        %v204 = vld [vmem:[%s172 + $0xe8] sm:$0xff]
        %v205 = vld [vmem:[%s172 + $0xf0] sm:$0xff]
        %v206 = vld [vmem:[%s172 + $0xf8] sm:$0xff]
        %v207 = vld [vmem:[%s172 + $0x100] sm:$0xff]
        %v208 = vld [vmem:[%s172 + $0x108] sm:$0xff]
        %v209 = vld [vmem:[%s172 + $0x110] sm:$0xff]
        %v210 = vld [vmem:[%s172 + $0x118] sm:$0xff]
        %v211 = vld [vmem:[%s172 + $0x120] sm:$0xff]
        %v212 = vld [vmem:[%s172 + $0x128] sm:$0xff]
        %v213 = vld [vmem:[%s172 + $0x130] sm:$0xff]
        %v214 = vld [vmem:[%s172 + $0x138] sm:$0xff]
        %v215 = vld [vmem:[%s172 + $0x140] sm:$0xff]
        %v216 = vld [vmem:[%s172 + $0x148] sm:$0xff]
        %v217 = vld [vmem:[%s172 + $0x150] sm:$0xff]
        %v218 = vld [vmem:[%s172 + $0x158] sm:$0xff]
        %v219 = vld [vmem:[%s172 + $0x160] sm:$0xff]
        %v220 = vld [vmem:[%s172 + $0x168] sm:$0xff]
        %v221 = vld [vmem:[%s172 + $0x170] sm:$0xff]
        %v222 = vld [vmem:[%s172 + $0x178] sm:$0xff]
        %v223 = vld [vmem:[%s172 + $0x180] sm:$0xff]
        %v224 = vld [vmem:[%s1] sm:$0xf]
        %v225 = vld [vmem:[%s1 + $0x4] sm:$0xf]
        %v226 = vld [vmem:[%s1 + $0x8] sm:$0xf]
        %v227 = vld [vmem:[%s1 + $0xc] sm:$0xf]
        %v228 = vld [vmem:[%s1 + $0x10] sm:$0xf]
        %v229 = vld [vmem:[%s1 + $0x14] sm:$0xf]
        %v230 = vld [vmem:[%s1 + $0x18] sm:$0xf]
        %v231 = vld [vmem:[%s1 + $0x1c] sm:$0xf]
        %v232 = vld [vmem:[%s1 + $0x20] sm:$0xf]
        %v233 = vld [vmem:[%s1 + $0x24] sm:$0xf]
        %v234 = vld [vmem:[%s1 + $0x28] sm:$0xf]
        %v235 = vld [vmem:[%s1 + $0x2c] sm:$0xf]
        %v236 = vld [vmem:[%s1 + $0x30] sm:$0xf]
        %v237 = vld [vmem:[%s1 + $0x34] sm:$0xf]
        %v238 = vld [vmem:[%s1 + $0x38] sm:$0xf]
        %v239 = vld [vmem:[%s1 + $0x3c] sm:$0xf]
        %v240 = vld [vmem:[%s1 + $0x40] sm:$0xf]
        %v241 = vld [vmem:[%s1 + $0x44] sm:$0xf]
        %v242 = vld [vmem:[%s2] sm:$0x1]
        %v244 = vperm.slane %v242, 0
        %v295 = vunpack.c.l.b16 %v175
        %v296 = vunpack.c.h.b16 %v175
        %v297 = vunpack.c.l.b16 %v176
        %v298 = vunpack.c.h.b16 %v176
        %v299 = vunpack.c.l.b16 %v177
        %v300 = vunpack.c.h.b16 %v177
        %v301 = vunpack.c.l.b16 %v178
        %v302 = vunpack.c.h.b16 %v178
        %v303 = vunpack.c.l.b16 %v179
        %v304 = vunpack.c.h.b16 %v179
        %v305 = vunpack.c.l.b16 %v180
        %v306 = vunpack.c.h.b16 %v180
        %v307 = vunpack.c.l.b16 %v181
        %v308 = vunpack.c.h.b16 %v181
        %v309 = vunpack.c.l.b16 %v182
        %v310 = vunpack.c.h.b16 %v182
        %v311 = vunpack.c.l.b16 %v183
        %v312 = vunpack.c.h.b16 %v183
        %v313 = vunpack.c.l.b16 %v184
        %v314 = vunpack.c.h.b16 %v184
        %v315 = vunpack.c.l.b16 %v185
        %v316 = vunpack.c.h.b16 %v185
        %v317 = vunpack.c.l.b16 %v186
        %v318 = vunpack.c.h.b16 %v186
        %v319 = vunpack.c.l.b16 %v187
        %v320 = vunpack.c.h.b16 %v187
        %v321 = vunpack.c.l.b16 %v188
        %v322 = vunpack.c.h.b16 %v188
        %v323 = vunpack.c.l.b16 %v189
        %v324 = vunpack.c.h.b16 %v189
        %v325 = vunpack.c.l.b16 %v190
        %v326 = vunpack.c.h.b16 %v190
        %v327 = vunpack.c.l.b16 %v191
        %v328 = vunpack.c.h.b16 %v191
        %v329 = vunpack.c.l.b16 %v192
        %v330 = vunpack.c.h.b16 %v192
        %v331 = vunpack.c.l.b16 %v193
        %v332 = vunpack.c.h.b16 %v193
        %v333 = vunpack.c.l.b16 %v194
        %v334 = vunpack.c.h.b16 %v194
        %v335 = vunpack.c.l.b16 %v195
        %v336 = vunpack.c.h.b16 %v195
        %v337 = vunpack.c.l.b16 %v196
        %v338 = vunpack.c.h.b16 %v196
        %v339 = vunpack.c.l.b16 %v197
        %v340 = vunpack.c.h.b16 %v197
        %v341 = vunpack.c.l.b16 %v198
        %v342 = vunpack.c.h.b16 %v198
        %v343 = vunpack.c.l.b16 %v199
        %v344 = vunpack.c.h.b16 %v199
        %v345 = vunpack.c.l.b16 %v200
        %v346 = vunpack.c.h.b16 %v200
        %v347 = vunpack.c.l.b16 %v201
        %v348 = vunpack.c.h.b16 %v201
        %v349 = vunpack.c.l.b16 %v202
        %v350 = vunpack.c.h.b16 %v202
        %v351 = vunpack.c.l.b16 %v203
        %v352 = vunpack.c.h.b16 %v203
        %v353 = vunpack.c.l.b16 %v204
        %v354 = vunpack.c.h.b16 %v204
        %v355 = vunpack.c.l.b16 %v205
        %v356 = vunpack.c.h.b16 %v205
        %v357 = vunpack.c.l.b16 %v206
        %v358 = vunpack.c.h.b16 %v206
        %v359 = vunpack.c.l.b16 %v207
        %v360 = vunpack.c.h.b16 %v207
        %v361 = vunpack.c.l.b16 %v208
        %v362 = vunpack.c.h.b16 %v208
        %v363 = vunpack.c.l.b16 %v209
        %v364 = vunpack.c.h.b16 %v209
        %v365 = vunpack.c.l.b16 %v210
        %v366 = vunpack.c.h.b16 %v210
        %v367 = vunpack.c.l.b16 %v211
        %v368 = vunpack.c.h.b16 %v211
        %v369 = vunpack.c.l.b16 %v212
        %v370 = vunpack.c.h.b16 %v212
        %v371 = vunpack.c.l.b16 %v213
        %v372 = vunpack.c.h.b16 %v213
        %v373 = vunpack.c.l.b16 %v214
        %v374 = vunpack.c.h.b16 %v214
        %v375 = vunpack.c.l.b16 %v215
        %v376 = vunpack.c.h.b16 %v215
        %v377 = vunpack.c.l.b16 %v216
        %v378 = vunpack.c.h.b16 %v216
        %v379 = vunpack.c.l.b16 %v217
        %v380 = vunpack.c.h.b16 %v217
        %v381 = vunpack.c.l.b16 %v218
        %v382 = vunpack.c.h.b16 %v218
        %v383 = vunpack.c.l.b16 %v219
        %v384 = vunpack.c.h.b16 %v219
        %v385 = vunpack.c.l.b16 %v220
        %v386 = vunpack.c.h.b16 %v220
        %v387 = vunpack.c.l.b16 %v221
        %v388 = vunpack.c.h.b16 %v221
        %v389 = vunpack.c.l.b16 %v222
        %v390 = vunpack.c.h.b16 %v222
        %v391 = vunpack.c.l.b16 %v223
        %v392 = vunpack.c.h.b16 %v223
        %v393 = vpack.c.b16 %v297, %v295
        %v394 = vpack.c.b16 %v298, %v296
        %v395 = vpack.c.b16 %v301, %v299
        %v396 = vpack.c.b16 %v302, %v300
        %v397 = vpack.c.b16 %v305, %v303
        %v398 = vpack.c.b16 %v306, %v304
        %v399 = vpack.c.b16 %v309, %v307
        %v400 = vpack.c.b16 %v310, %v308
        %v401 = vpack.c.b16 %v313, %v311
        %v402 = vpack.c.b16 %v314, %v312
        %v403 = vpack.c.b16 %v317, %v315
        %v404 = vpack.c.b16 %v318, %v316
        %v405 = vpack.c.b16 %v321, %v319
        %v406 = vpack.c.b16 %v322, %v320
        %v407 = vpack.c.b16 %v325, %v323
        %v408 = vpack.c.b16 %v326, %v324
        %v409 = vpack.c.b16 %v329, %v327
        %v410 = vpack.c.b16 %v330, %v328
        %v411 = vpack.c.b16 %v333, %v331
        %v412 = vpack.c.b16 %v334, %v332
        %v413 = vpack.c.b16 %v337, %v335
        %v414 = vpack.c.b16 %v338, %v336
        %v415 = vpack.c.b16 %v341, %v339
        %v416 = vpack.c.b16 %v342, %v340
        %v417 = vpack.c.b16 %v345, %v343
        %v418 = vpack.c.b16 %v346, %v344
        %v419 = vpack.c.b16 %v349, %v347
        %v420 = vpack.c.b16 %v350, %v348
        %v421 = vpack.c.b16 %v353, %v351
        %v422 = vpack.c.b16 %v354, %v352
        %v423 = vpack.c.b16 %v357, %v355
        %v424 = vpack.c.b16 %v358, %v356
        %v425 = vpack.c.b16 %v361, %v359
        %v426 = vpack.c.b16 %v362, %v360
        %v427 = vpack.c.b16 %v365, %v363
        %v428 = vpack.c.b16 %v366, %v364
        %v429 = vpack.c.b16 %v369, %v367
        %v430 = vpack.c.b16 %v370, %v368
        %v431 = vpack.c.b16 %v373, %v371
        %v432 = vpack.c.b16 %v374, %v372
        %v433 = vpack.c.b16 %v377, %v375
        %v434 = vpack.c.b16 %v378, %v376
        %v435 = vpack.c.b16 %v381, %v379
        %v436 = vpack.c.b16 %v382, %v380
        %v437 = vpack.c.b16 %v385, %v383
        %v438 = vpack.c.b16 %v386, %v384
        %v439 = vpack.c.b16 %v389, %v387
        %v440 = vpack.c.b16 %v390, %v388
        %v441 = vpack.c.b16 %v391, %v391
        %v442 = vpack.c.b16 %v392, %v392
        %v486 = vunpack.c.l.b16 %v224
        %v487 = vunpack.c.l.b16 %v225
        %v488 = vunpack.c.l.b16 %v226
        %v489 = vunpack.c.l.b16 %v227
        %v490 = vunpack.c.l.b16 %v228
        %v491 = vunpack.c.l.b16 %v229
        %v492 = vunpack.c.l.b16 %v230
        %v493 = vunpack.c.l.b16 %v231
        %v494 = vunpack.c.l.b16 %v232
        %v495 = vunpack.c.l.b16 %v233
        %v496 = vunpack.c.l.b16 %v234
        %v497 = vunpack.c.l.b16 %v235
        %v498 = vunpack.c.l.b16 %v236
        %v499 = vunpack.c.l.b16 %v237
        %v500 = vunpack.c.l.b16 %v238
        %v501 = vunpack.c.l.b16 %v239
        %v502 = vunpack.c.l.b16 %v240
        %v503 = vunpack.c.l.b16 %v241
        %v504 = vpack.c.b16 %v487, %v486
        %v505 = vpack.c.b16 %v489, %v488
        %v506 = vpack.c.b16 %v491, %v490
        %v507 = vpack.c.b16 %v493, %v492
        %v508 = vpack.c.b16 %v495, %v494
        %v509 = vpack.c.b16 %v497, %v496
        %v510 = vpack.c.b16 %v499, %v498
        %v511 = vpack.c.b16 %v501, %v500
        %v512 = vpack.c.b16 %v503, %v502
        %vm522 = vcmask 130048
        %v524 = vsel %vm522, %v394, 0
        %v527 = vsel %vm522, %v396, 0
        %v530 = vsel %vm522, %v398, 0
        %v533 = vsel %vm522, %v400, 0
        %v536 = vsel %vm522, %v402, 0
        %v539 = vsel %vm522, %v404, 0
        %v542 = vsel %vm522, %v406, 0
        %v545 = vsel %vm522, %v408, 0
        %v548 = vsel %vm522, %v410, 0
        %v551 = vsel %vm522, %v412, 0
        %v554 = vsel %vm522, %v414, 0
        %v557 = vsel %vm522, %v416, 0
        %v560 = vsel %vm522, %v418, 0
        %v563 = vsel %vm522, %v420, 0
        %v566 = vsel %vm522, %v422, 0
        %v569 = vsel %vm522, %v424, 0
        %v572 = vsel %vm522, %v426, 0
        %v575 = vsel %vm522, %v428, 0
        %v578 = vsel %vm522, %v430, 0
        %v581 = vsel %vm522, %v432, 0
        %v584 = vsel %vm522, %v434, 0
        %v587 = vsel %vm522, %v436, 0
        %v590 = vsel %vm522, %v438, 0
        %v593 = vsel %vm522, %v440, 0
        %v596 = vsel %vm522, %v442, 0
        %598 = vmatpush.bf16.msra.mxu0 %v511
        %599 = vmatpush.bf16.msra.mxu0 %v510
        %600 = vmatpush.bf16.msra.mxu0 %v509
        %601 = vmatpush.bf16.msra.mxu0 %v508
        %602 = vmatpush.bf16.msra.mxu0 %v507
        %603 = vmatpush.bf16.msra.mxu0 %v506
        %604 = vmatpush.bf16.msra.mxu0 %v505
        %605 = vmatpush.bf16.msra.mxu0 %v504
        %606 = vmatmul.bf16.gmra.mxu0 %v393
        %v607 = vpop.f32.mrf.mxu0
        %v608 = vadd.f32 %v244, %v607
        %v609 = vpop.f32.mrf.mxu0
        %v610 = vadd.f32 %v244, %v609
        %611 = vmatmul.bf16.gmra.mxu0 %v395
        %v612 = vpop.f32.mrf.mxu0
        %v613 = vadd.f32 %v244, %v612
        %v614 = vpop.f32.mrf.mxu0
        %v615 = vadd.f32 %v244, %v614
        %616 = vmatmul.bf16.gmra.mxu0 %v397
        %v617 = vpop.f32.mrf.mxu0
        %v618 = vadd.f32 %v244, %v617
        %v619 = vpop.f32.mrf.mxu0
        %v620 = vadd.f32 %v244, %v619
        %621 = vmatmul.bf16.gmra.mxu0 %v399
        %v622 = vpop.f32.mrf.mxu0
        %v623 = vadd.f32 %v244, %v622
        %v624 = vpop.f32.mrf.mxu0
        %v625 = vadd.f32 %v244, %v624
        %626 = vmatmul.bf16.gmra.mxu0 %v401
        %v627 = vpop.f32.mrf.mxu0
        %v628 = vadd.f32 %v244, %v627
        %v629 = vpop.f32.mrf.mxu0
        %v630 = vadd.f32 %v244, %v629
        %631 = vmatmul.bf16.gmra.mxu0 %v403
        %v632 = vpop.f32.mrf.mxu0
        %v633 = vadd.f32 %v244, %v632
        %v634 = vpop.f32.mrf.mxu0
        %v635 = vadd.f32 %v244, %v634
        %636 = vmatmul.bf16.gmra.mxu0 %v405
        %v637 = vpop.f32.mrf.mxu0
        %v638 = vadd.f32 %v244, %v637
        %v639 = vpop.f32.mrf.mxu0
        %v640 = vadd.f32 %v244, %v639
        %641 = vmatmul.bf16.gmra.mxu0 %v407
        %v642 = vpop.f32.mrf.mxu0
        %v643 = vadd.f32 %v244, %v642
        %v644 = vpop.f32.mrf.mxu0
        %v645 = vadd.f32 %v244, %v644
        %646 = vmatmul.bf16.gmra.mxu0 %v409
        %v647 = vpop.f32.mrf.mxu0
        %v648 = vadd.f32 %v244, %v647
        %v649 = vpop.f32.mrf.mxu0
        %v650 = vadd.f32 %v244, %v649
        %651 = vmatmul.bf16.gmra.mxu0 %v411
        %v652 = vpop.f32.mrf.mxu0
        %v653 = vadd.f32 %v244, %v652
        %v654 = vpop.f32.mrf.mxu0
        %v655 = vadd.f32 %v244, %v654
        %656 = vmatmul.bf16.gmra.mxu0 %v413
        %v657 = vpop.f32.mrf.mxu0
        %v658 = vadd.f32 %v244, %v657
        %v659 = vpop.f32.mrf.mxu0
        %v660 = vadd.f32 %v244, %v659
        %661 = vmatmul.bf16.gmra.mxu0 %v415
        %v662 = vpop.f32.mrf.mxu0
        %v663 = vadd.f32 %v244, %v662
        %v664 = vpop.f32.mrf.mxu0
        %v665 = vadd.f32 %v244, %v664
        %666 = vmatmul.bf16.gmra.mxu0 %v417
        %v667 = vpop.f32.mrf.mxu0
        %v668 = vadd.f32 %v244, %v667
        %v669 = vpop.f32.mrf.mxu0
        %v670 = vadd.f32 %v244, %v669
        %671 = vmatmul.bf16.gmra.mxu0 %v419
        %v672 = vpop.f32.mrf.mxu0
        %v673 = vadd.f32 %v244, %v672
        %v674 = vpop.f32.mrf.mxu0
        %v675 = vadd.f32 %v244, %v674
        %676 = vmatmul.bf16.gmra.mxu0 %v421
        %v677 = vpop.f32.mrf.mxu0
        %v678 = vadd.f32 %v244, %v677
        %v679 = vpop.f32.mrf.mxu0
        %v680 = vadd.f32 %v244, %v679
        %681 = vmatmul.bf16.gmra.mxu0 %v423
        %v682 = vpop.f32.mrf.mxu0
        %v683 = vadd.f32 %v244, %v682
        %v684 = vpop.f32.mrf.mxu0
        %v685 = vadd.f32 %v244, %v684
        %686 = vmatmul.bf16.gmra.mxu0 %v425
        %v687 = vpop.f32.mrf.mxu0
        %v688 = vadd.f32 %v244, %v687
        %v689 = vpop.f32.mrf.mxu0
        %v690 = vadd.f32 %v244, %v689
        %691 = vmatmul.bf16.gmra.mxu0 %v427
        %v692 = vpop.f32.mrf.mxu0
        %v693 = vadd.f32 %v244, %v692
        %v694 = vpop.f32.mrf.mxu0
        %v695 = vadd.f32 %v244, %v694
        %696 = vmatmul.bf16.gmra.mxu0 %v429
        %v697 = vpop.f32.mrf.mxu0
        %v698 = vadd.f32 %v244, %v697
        %v699 = vpop.f32.mrf.mxu0
        %v700 = vadd.f32 %v244, %v699
        %701 = vmatmul.bf16.gmra.mxu0 %v431
        %v702 = vpop.f32.mrf.mxu0
        %v703 = vadd.f32 %v244, %v702
        %v704 = vpop.f32.mrf.mxu0
        %v705 = vadd.f32 %v244, %v704
        %706 = vmatmul.bf16.gmra.mxu0 %v433
        %v707 = vpop.f32.mrf.mxu0
        %v708 = vadd.f32 %v244, %v707
        %v709 = vpop.f32.mrf.mxu0
        %v710 = vadd.f32 %v244, %v709
        %711 = vmatmul.bf16.gmra.mxu0 %v435
        %v712 = vpop.f32.mrf.mxu0
        %v713 = vadd.f32 %v244, %v712
        %v714 = vpop.f32.mrf.mxu0
        %v715 = vadd.f32 %v244, %v714
        %716 = vmatmul.bf16.gmra.mxu0 %v437
        %v717 = vpop.f32.mrf.mxu0
        %v718 = vadd.f32 %v244, %v717
        %v719 = vpop.f32.mrf.mxu0
        %v720 = vadd.f32 %v244, %v719
        %721 = vmatmul.bf16.gmra.mxu0 %v439
        %v722 = vpop.f32.mrf.mxu0
        %v723 = vadd.f32 %v244, %v722
        %v724 = vpop.f32.mrf.mxu0
        %v725 = vadd.f32 %v244, %v724
        %726 = vmatmul.bf16.gmra.mxu0 %v441
        %v727 = vpop.f32.mrf.mxu0
        %v728 = vadd.f32 %v244, %v727
        %v729 = vpop.f32.mrf.mxu0
        %730 = vdwg.mxu0
        %731 = vmatpush.bf16.msra.mxu0 0
        %732 = vmatpush.bf16.msra.mxu0 0
        %733 = vmatpush.bf16.msra.mxu0 0
        %734 = vmatpush.bf16.msra.mxu0 0
        %735 = vmatpush.bf16.msra.mxu0 0
        %736 = vmatpush.bf16.msra.mxu0 0
        %737 = vmatpush.bf16.msra.mxu0 0
        %738 = vmatpush.bf16.msra.mxu0 %v512
        %739 = vmatmul.bf16.gmra.mxu0 %v524
        %v740 = vpop.f32.mrf.mxu0
        %v741 = vadd.f32 %v608, %v740
        %v742 = vpop.f32.mrf.mxu0
        %v743 = vadd.f32 %v610, %v742
        %744 = vmatmul.bf16.gmra.mxu0 %v527
        %v745 = vpop.f32.mrf.mxu0
        %v746 = vadd.f32 %v613, %v745
        %v747 = vpop.f32.mrf.mxu0
        %v748 = vadd.f32 %v615, %v747
        %749 = vmatmul.bf16.gmra.mxu0 %v530
        %v750 = vpop.f32.mrf.mxu0
        %v751 = vadd.f32 %v618, %v750
        %v752 = vpop.f32.mrf.mxu0
        %v753 = vadd.f32 %v620, %v752
        %754 = vmatmul.bf16.gmra.mxu0 %v533
        %v755 = vpop.f32.mrf.mxu0
        %v756 = vadd.f32 %v623, %v755
        %v757 = vpop.f32.mrf.mxu0
        %v758 = vadd.f32 %v625, %v757
        %759 = vmatmul.bf16.gmra.mxu0 %v536
        %v760 = vpop.f32.mrf.mxu0
        %v761 = vadd.f32 %v628, %v760
        %v762 = vpop.f32.mrf.mxu0
        %v763 = vadd.f32 %v630, %v762
        %764 = vmatmul.bf16.gmra.mxu0 %v539
        %v765 = vpop.f32.mrf.mxu0
        %v766 = vadd.f32 %v633, %v765
        %v767 = vpop.f32.mrf.mxu0
        %v768 = vadd.f32 %v635, %v767
        %769 = vmatmul.bf16.gmra.mxu0 %v542
        %v770 = vpop.f32.mrf.mxu0
        %v771 = vadd.f32 %v638, %v770
        %v772 = vpop.f32.mrf.mxu0
        %v773 = vadd.f32 %v640, %v772
        %774 = vmatmul.bf16.gmra.mxu0 %v545
        %v775 = vpop.f32.mrf.mxu0
        %v776 = vadd.f32 %v643, %v775
        %v777 = vpop.f32.mrf.mxu0
        %v778 = vadd.f32 %v645, %v777
        %779 = vmatmul.bf16.gmra.mxu0 %v548
        %v780 = vpop.f32.mrf.mxu0
        %v781 = vadd.f32 %v648, %v780
        %v782 = vpop.f32.mrf.mxu0
        %v783 = vadd.f32 %v650, %v782
        %784 = vmatmul.bf16.gmra.mxu0 %v551
        %v785 = vpop.f32.mrf.mxu0
        %v786 = vadd.f32 %v653, %v785
        %v787 = vpop.f32.mrf.mxu0
        %v788 = vadd.f32 %v655, %v787
        %789 = vmatmul.bf16.gmra.mxu0 %v554
        %v790 = vpop.f32.mrf.mxu0
        %v791 = vadd.f32 %v658, %v790
        %v792 = vpop.f32.mrf.mxu0
        %v793 = vadd.f32 %v660, %v792
        %794 = vmatmul.bf16.gmra.mxu0 %v557
        %v795 = vpop.f32.mrf.mxu0
        %v796 = vadd.f32 %v663, %v795
        %v797 = vpop.f32.mrf.mxu0
        %v798 = vadd.f32 %v665, %v797
        %799 = vmatmul.bf16.gmra.mxu0 %v560
        %v800 = vpop.f32.mrf.mxu0
        %v801 = vadd.f32 %v668, %v800
        %v802 = vpop.f32.mrf.mxu0
        %v803 = vadd.f32 %v670, %v802
        %804 = vmatmul.bf16.gmra.mxu0 %v563
        %v805 = vpop.f32.mrf.mxu0
        %v806 = vadd.f32 %v673, %v805
        %v807 = vpop.f32.mrf.mxu0
        %v808 = vadd.f32 %v675, %v807
        %809 = vmatmul.bf16.gmra.mxu0 %v566
        %v810 = vpop.f32.mrf.mxu0
        %v811 = vadd.f32 %v678, %v810
        %v812 = vpop.f32.mrf.mxu0
        %v813 = vadd.f32 %v680, %v812
        %814 = vmatmul.bf16.gmra.mxu0 %v569
        %v815 = vpop.f32.mrf.mxu0
        %v816 = vadd.f32 %v683, %v815
        %v817 = vpop.f32.mrf.mxu0
        %v818 = vadd.f32 %v685, %v817
        %819 = vmatmul.bf16.gmra.mxu0 %v572
        %v820 = vpop.f32.mrf.mxu0
        %v821 = vadd.f32 %v688, %v820
        %v822 = vpop.f32.mrf.mxu0
        %v823 = vadd.f32 %v690, %v822
        %824 = vmatmul.bf16.gmra.mxu0 %v575
        %v825 = vpop.f32.mrf.mxu0
        %v826 = vadd.f32 %v693, %v825
        %v827 = vpop.f32.mrf.mxu0
        %v828 = vadd.f32 %v695, %v827
        %829 = vmatmul.bf16.gmra.mxu0 %v578
        %v830 = vpop.f32.mrf.mxu0
        %v831 = vadd.f32 %v698, %v830
        %v832 = vpop.f32.mrf.mxu0
        %v833 = vadd.f32 %v700, %v832
        %834 = vmatmul.bf16.gmra.mxu0 %v581
        %v835 = vpop.f32.mrf.mxu0
        %v836 = vadd.f32 %v703, %v835
        %v837 = vpop.f32.mrf.mxu0
        %v838 = vadd.f32 %v705, %v837
        %839 = vmatmul.bf16.gmra.mxu0 %v584
        %v840 = vpop.f32.mrf.mxu0
        %v841 = vadd.f32 %v708, %v840
        %v842 = vpop.f32.mrf.mxu0
        %v843 = vadd.f32 %v710, %v842
        %844 = vmatmul.bf16.gmra.mxu0 %v587
        %v845 = vpop.f32.mrf.mxu0
        %v846 = vadd.f32 %v713, %v845
        %v847 = vpop.f32.mrf.mxu0
        %v848 = vadd.f32 %v715, %v847
        %849 = vmatmul.bf16.gmra.mxu0 %v590
        %v850 = vpop.f32.mrf.mxu0
        %v851 = vadd.f32 %v718, %v850
        %v852 = vpop.f32.mrf.mxu0
        %v853 = vadd.f32 %v720, %v852
        %854 = vmatmul.bf16.gmra.mxu0 %v593
        %v855 = vpop.f32.mrf.mxu0
        %v856 = vadd.f32 %v723, %v855
        %v857 = vpop.f32.mrf.mxu0
        %v858 = vadd.f32 %v725, %v857
        %859 = vmatmul.bf16.gmra.mxu0 %v596
        %v860 = vpop.f32.mrf.mxu0
        %v861 = vadd.f32 %v728, %v860
        %v862 = vpop.f32.mrf.mxu0
        %863 = vdwg.mxu0
        %v864 = vmax.f32 %v741, 0.0
        %v865 = vmax.f32 %v743, 0.0
        %v866 = vmax.f32 %v746, 0.0
        %v867 = vmax.f32 %v748, 0.0
        %v868 = vmax.f32 %v751, 0.0
        %v869 = vmax.f32 %v753, 0.0
        %v870 = vmax.f32 %v756, 0.0
        %v871 = vmax.f32 %v758, 0.0
        %v872 = vmax.f32 %v761, 0.0
        %v873 = vmax.f32 %v763, 0.0
        %v874 = vmax.f32 %v766, 0.0
        %v875 = vmax.f32 %v768, 0.0
        %v876 = vmax.f32 %v771, 0.0
        %v877 = vmax.f32 %v773, 0.0
        %v878 = vmax.f32 %v776, 0.0
        %v879 = vmax.f32 %v778, 0.0
        %v880 = vmax.f32 %v781, 0.0
        %v881 = vmax.f32 %v783, 0.0
        %v882 = vmax.f32 %v786, 0.0
        %v883 = vmax.f32 %v788, 0.0
        %v884 = vmax.f32 %v791, 0.0
        %v885 = vmax.f32 %v793, 0.0
        %v886 = vmax.f32 %v796, 0.0
        %v887 = vmax.f32 %v798, 0.0
        %v888 = vmax.f32 %v801, 0.0
        %v889 = vmax.f32 %v803, 0.0
        %v890 = vmax.f32 %v806, 0.0
        %v891 = vmax.f32 %v808, 0.0
        %v892 = vmax.f32 %v811, 0.0
        %v893 = vmax.f32 %v813, 0.0
        %v894 = vmax.f32 %v816, 0.0
        %v895 = vmax.f32 %v818, 0.0
        %v896 = vmax.f32 %v821, 0.0
        %v897 = vmax.f32 %v823, 0.0
        %v898 = vmax.f32 %v826, 0.0
        %v899 = vmax.f32 %v828, 0.0
        %v900 = vmax.f32 %v831, 0.0
        %v901 = vmax.f32 %v833, 0.0
        %v902 = vmax.f32 %v836, 0.0
        %v903 = vmax.f32 %v838, 0.0
        %v904 = vmax.f32 %v841, 0.0
        %v905 = vmax.f32 %v843, 0.0
        %v906 = vmax.f32 %v846, 0.0
        %v907 = vmax.f32 %v848, 0.0
        %v908 = vmax.f32 %v851, 0.0
        %v909 = vmax.f32 %v853, 0.0
        %v910 = vmax.f32 %v856, 0.0
        %v911 = vmax.f32 %v858, 0.0
        %v912 = vmax.f32 %v861, 0.0
        %vm920 = vcmask 1046528
        %v921 = vrot.slane %v870, 1
        %v922 = vrot.slane %v871, 1
        %v923 = vsel %vm920, %v921, %v922
        %v924 = vrot.slane %v872, 1
        %v925 = vsel %vm920, %v922, %v924
        %v926 = vrot.slane %v873, 1
        %v927 = vsel %vm920, %v924, %v926
        %v928 = vrot.slane %v874, 1
        %v929 = vsel %vm920, %v926, %v928
        %v930 = vrot.slane %v875, 1
        %v931 = vsel %vm920, %v928, %v930
        %v932 = vrot.slane %v876, 1
        %v933 = vsel %vm920, %v930, %v932
        %v941 = vmax.f32 %v864, %v923
        %v942 = vmax.f32 %v865, %v925
        %v943 = vmax.f32 %v866, %v927
        %v944 = vmax.f32 %v867, %v929
        %v945 = vmax.f32 %v868, %v931
        %v946 = vmax.f32 %v869, %v933
        %v947 = vmax.f32 %v870, %v932
        %v955 = vrot.slane %v882, 1
        %v956 = vrot.slane %v883, 1
        %v957 = vsel %vm920, %v955, %v956
        %v958 = vrot.slane %v884, 1
        %v959 = vsel %vm920, %v956, %v958
        %v960 = vrot.slane %v885, 1
        %v961 = vsel %vm920, %v958, %v960
        %v962 = vrot.slane %v886, 1
        %v963 = vsel %vm920, %v960, %v962
        %v964 = vrot.slane %v887, 1
        %v965 = vsel %vm920, %v962, %v964
        %v966 = vrot.slane %v888, 1
        %v967 = vsel %vm920, %v964, %v966
        %v975 = vmax.f32 %v876, %v957
        %v976 = vmax.f32 %v877, %v959
        %v977 = vmax.f32 %v878, %v961
        %v978 = vmax.f32 %v879, %v963
        %v979 = vmax.f32 %v880, %v965
        %v980 = vmax.f32 %v881, %v967
        %v981 = vmax.f32 %v882, %v966
        %vm989 = vcmask 1045504
        %v990 = vrot.slane %v975, 2
        %v991 = vrot.slane %v976, 2
        %v992 = vsel %vm989, %v990, %v991
        %v993 = vrot.slane %v977, 2
        %v994 = vsel %vm989, %v991, %v993
        %v995 = vrot.slane %v978, 2
        %v996 = vsel %vm989, %v993, %v995
        %v997 = vrot.slane %v979, 2
        %v998 = vsel %vm989, %v995, %v997
        %v999 = vrot.slane %v980, 2
        %v1000 = vsel %vm989, %v997, %v999
        %v1001 = vrot.slane %v981, 2
        %v1002 = vsel %vm989, %v999, %v1001
        %v1010 = vmax.f32 %v941, %v992
        %v1011 = vmax.f32 %v942, %v994
        %v1012 = vmax.f32 %v943, %v996
        %v1013 = vmax.f32 %v944, %v998
        %v1014 = vmax.f32 %v945, %v1000
        %v1015 = vmax.f32 %v946, %v1002
        %v1016 = vmax.f32 %v947, %v1001
        %vm1017 = vcmask 261120
        %v1018 = vsel %vm1017, %v1010, 0.0
        %v1019 = vsel %vm1017, %v1011, 0.0
        %v1020 = vadd.f32 %v1018, %v1019
        %v1021 = vsel %vm1017, %v1012, 0.0
        %v1022 = vadd.f32 %v1020, %v1021
        %v1023 = vsel %vm1017, %v1013, 0.0
        %v1024 = vadd.f32 %v1022, %v1023
        %v1025 = vsel %vm1017, %v1014, 0.0
        %v1026 = vadd.f32 %v1024, %v1025
        %v1027 = vsel %vm1017, %v1015, 0.0
        %v1028 = vadd.f32 %v1026, %v1027
        %vm1029 = vcmask 253952
        %v1030 = vsel %vm1029, %v1016, 0.0
        %v1031 = vadd.f32 %v1028, %v1030
        %v1032 = vrot.slane %v1031, 4
        %v1033 = vadd.f32 %v1031, %v1032
        %v1034 = vrot.slane %v1033, 2
        %v1035 = vadd.f32 %v1033, %v1034
        %v1036 = vrot.slane %v1035, 1
        %v1037 = vadd.f32 %v1035, %v1036
        %v1038 = vmul.f32 %v1037, 0.020408163
        %v1046 = vrot.slane %v894, 1
        %v1047 = vrot.slane %v895, 1
        %v1048 = vsel %vm920, %v1046, %v1047
        %v1049 = vrot.slane %v896, 1
        %v1050 = vsel %vm920, %v1047, %v1049
        %v1051 = vrot.slane %v897, 1
        %v1052 = vsel %vm920, %v1049, %v1051
        %v1053 = vrot.slane %v898, 1
        %v1054 = vsel %vm920, %v1051, %v1053
        %v1055 = vrot.slane %v899, 1
        %v1056 = vsel %vm920, %v1053, %v1055
        %v1057 = vrot.slane %v900, 1
        %v1058 = vsel %vm920, %v1055, %v1057
        %v1066 = vmax.f32 %v888, %v1048
        %v1067 = vmax.f32 %v889, %v1050
        %v1068 = vmax.f32 %v890, %v1052
        %v1069 = vmax.f32 %v891, %v1054
        %v1070 = vmax.f32 %v892, %v1056
        %v1071 = vmax.f32 %v893, %v1058
        %v1072 = vmax.f32 %v894, %v1057
        %v1080 = vrot.slane %v906, 1
        %v1081 = vrot.slane %v907, 1
        %v1082 = vsel %vm920, %v1080, %v1081
        %v1083 = vrot.slane %v908, 1
        %v1084 = vsel %vm920, %v1081, %v1083
        %v1085 = vrot.slane %v909, 1
        %v1086 = vsel %vm920, %v1083, %v1085
        %v1087 = vrot.slane %v910, 1
        %v1088 = vsel %vm920, %v1085, %v1087
        %v1089 = vrot.slane %v911, 1
        %v1090 = vsel %vm920, %v1087, %v1089
        %v1091 = vrot.slane %v912, 1
        %v1092 = vsel %vm920, %v1089, %v1091
        %v1100 = vmax.f32 %v900, %v1082
        %v1101 = vmax.f32 %v901, %v1084
        %v1102 = vmax.f32 %v902, %v1086
        %v1103 = vmax.f32 %v903, %v1088
        %v1104 = vmax.f32 %v904, %v1090
        %v1105 = vmax.f32 %v905, %v1092
        %v1106 = vmax.f32 %v906, %v1091
        %v1114 = vrot.slane %v1100, 2
        %v1115 = vrot.slane %v1101, 2
        %v1116 = vsel %vm989, %v1114, %v1115
        %v1117 = vrot.slane %v1102, 2
        %v1118 = vsel %vm989, %v1115, %v1117
        %v1119 = vrot.slane %v1103, 2
        %v1120 = vsel %vm989, %v1117, %v1119
        %v1121 = vrot.slane %v1104, 2
        %v1122 = vsel %vm989, %v1119, %v1121
        %v1123 = vrot.slane %v1105, 2
        %v1124 = vsel %vm989, %v1121, %v1123
        %v1125 = vrot.slane %v1106, 2
        %v1126 = vsel %vm989, %v1123, %v1125
        %v1134 = vmax.f32 %v1066, %v1116
        %v1135 = vmax.f32 %v1067, %v1118
        %v1136 = vmax.f32 %v1068, %v1120
        %v1137 = vmax.f32 %v1069, %v1122
        %v1138 = vmax.f32 %v1070, %v1124
        %v1139 = vmax.f32 %v1071, %v1126
        %v1140 = vmax.f32 %v1072, %v1125
        %vm1148 = vcmask 1043456
        %v1149 = vrot.slane %v1134, 4
        %v1150 = vrot.slane %v1135, 4
        %v1151 = vsel %vm1148, %v1149, %v1150
        %v1152 = vrot.slane %v1136, 4
        %v1153 = vsel %vm1148, %v1150, %v1152
        %v1154 = vrot.slane %v1137, 4
        %v1155 = vsel %vm1148, %v1152, %v1154
        %v1156 = vrot.slane %v1138, 4
        %v1157 = vsel %vm1148, %v1154, %v1156
        %v1158 = vrot.slane %v1139, 4
        %v1159 = vsel %vm1148, %v1156, %v1158
        %v1160 = vrot.slane %v1140, 4
        %v1161 = vsel %vm1148, %v1158, %v1160
        %v1169 = vsel %vm1017, %v1151, 0.0
        %v1170 = vsel %vm1017, %v1153, 0.0
        %v1171 = vadd.f32 %v1169, %v1170
        %v1172 = vsel %vm1017, %v1155, 0.0
        %v1173 = vadd.f32 %v1171, %v1172
        %v1174 = vsel %vm1017, %v1157, 0.0
        %v1175 = vadd.f32 %v1173, %v1174
        %v1176 = vsel %vm1017, %v1159, 0.0
        %v1177 = vadd.f32 %v1175, %v1176
        %v1178 = vsel %vm1017, %v1161, 0.0
        %v1179 = vadd.f32 %v1177, %v1178
        %v1180 = vsel %vm1029, %v1160, 0.0
        %v1181 = vadd.f32 %v1179, %v1180
        %v1182 = vrot.slane %v1181, 4
        %v1183 = vadd.f32 %v1181, %v1182
        %v1184 = vrot.slane %v1183, 2
        %v1185 = vadd.f32 %v1183, %v1184
        %v1186 = vrot.slane %v1185, 1
        %v1187 = vadd.f32 %v1185, %v1186
        %v1188 = vmul.f32 %v1187, 0.020408163
        %vm1189 = vcmask 1040384
        %v1190 = vsel %vm1189, %v1038, %v1188
        %vm1191 = vcmask 254976
        %1192 = vst.msk [vmem:[%s166] sm:$0x3] %vm1191, %v1190
        %s1193 = sand.u32 %s93, 1
        %s1194 = scalar_lea.sflag [#allocation3], %s1193
        %s1195 = sand.u32 %s93, 1
        %s1196 = smul.addr %s1195, 2
        %s1197 = scalar_lea.vmem [#allocation2], %s1196
        // Predicated region
        $region33: #{tpu_custom_call.1} parent=31 // pred_check
          %p1198 = pneg %p103
        $region34: #{tpu_custom_call.1} parent=31 // pred_check_branch
          %1200 = sbr.rel (%p1198) target = $region36
        $region35: #{tpu_custom_call.1} parent=31 // pred_region
          %1202 = vsyncadd %s1194, 0
          %s1203 = smul.addr %s17, 2
          %s1204 = scalar_lea.hbm %s3, %s1203
          %s1206 = sshll.u32 %s1197, 4
          %s1207 = int_to_ptr.vmem [resolvable:$true] %s1206
          %s1208 = sshll.u32 %s1204, 4
          %s1209 = int_to_ptr.hbm [resolvable:$true] %s1208
          %1211 = dma.vmem_to_hbm [thread:$0]  %s1207, 32, %s1209, %s1194
        $region36: #{tpu_custom_call.1} parent=31 // pred_fallthru
          _
      $region32: #{tpu_custom_call.1} parent=5 // pred_fallthru
        _
      %p1212 = scmp.le.s32.totalorder 2, %s12
      // Predicated region
      $region37: #{tpu_custom_call.1} parent=5 // pred_check
        %p1213 = pneg %p1212
      $region38: #{tpu_custom_call.1} parent=5 // pred_check_branch
        %1215 = sbr.rel (%p1213) target = $region40
      $region39: #{tpu_custom_call.1} parent=5 // pred_region
        %s1216 = ssub.s32 %s12, 2
        // Predicated region
        $region41: #{tpu_custom_call.1} parent=39 // pred_check
          %p1217 = pneg %p109
        $region42: #{tpu_custom_call.1} parent=39 // pred_check_branch
          %1219 = sbr.rel (%p1217) target = $region44
        $region43: #{tpu_custom_call.1} parent=39 // pred_region
          %s1220 = sand.u32 %s94, 1
          %s1221 = scalar_lea.sflag [#allocation3], %s1220
          %s1222 = sand.u32 %s94, 1
          %s1223 = smul.addr %s1222, 2
          %s1224 = scalar_lea.vmem [#allocation2], %s1223
          %1226 = dma.done %s1221, 32
        $region44: #{tpu_custom_call.1} parent=39 // pred_fallthru
          _
      $region40: #{tpu_custom_call.1} parent=5 // pred_fallthru
        _
    $region6: #{tpu_custom_call.1} parent=1 // loop_footer
      %s16 = sadd.s32 1, %s12
    $region7: #{tpu_custom_call.1} parent=1 // loop_footer_branch
      %11 = sbr.rel target = $region3
    $region8: #{tpu_custom_call.1} parent=1 // loop_exit
      _
    %1227 = vsyncpa [#allocation3], 1
    %s1228 = scalar_lea.sflag [#allocation3], 1
    %1229 = vsyncpa %s1228, 1

</llo_original>
